<compile_context>
chip_gen: v7x
topology: tpu7x:2x2x1
jax: 0.10.0
libtpu: 0.0.40
codegen_flags: <defaults>
</compile_context>

<pallas_src>
import functools

import jax
import jax.numpy as jnp
from jax import lax
from jax.experimental import pallas as pl
from jax.experimental.pallas import tpu as pltpu


def _cross_attention_kernel(x_ref, bm_ref, wq_ref, wk_ref, wv_ref, wo_ref,
                            bo_ref, o_ref, *, heads, dim_head, scale,
                            matmul_dtype):
    x = x_ref[0].astype(matmul_dtype)       # (N, dim)
    bm = bm_ref[0].astype(matmul_dtype)     # (M, dim)
    wq = wq_ref[...].astype(matmul_dtype)   # (dim, inner_dim)
    wk = wk_ref[...].astype(matmul_dtype)   # (dim, inner_dim)
    wv = wv_ref[...].astype(matmul_dtype)   # (dim, inner_dim)
    wo = wo_ref[...].astype(matmul_dtype)   # (inner_dim, dim)
    bo = bo_ref[...]                        # (1, dim) f32

    # Fused projections for all heads at once (one MXU pass each).
    q = jnp.dot(x, wq, preferred_element_type=jnp.float32)    # (N, inner_dim)
    k = jnp.dot(bm, wk, preferred_element_type=jnp.float32)   # (M, inner_dim)
    v = jnp.dot(bm, wv, preferred_element_type=jnp.float32)   # (M, inner_dim)

    n = x.shape[0]
    dim = wo.shape[1]
    acc = jnp.zeros((n, dim), jnp.float32)                     # output accum (f32)

    # Per-head scaled dot-product attention, statically unrolled (heads small).
    for h in range(heads):
        lo = h * dim_head
        hi = lo + dim_head
        q_h = q[:, lo:hi].astype(matmul_dtype)                 # (N, dh)
        k_h = k[:, lo:hi].astype(matmul_dtype)                 # (M, dh)
        v_h = v[:, lo:hi].astype(matmul_dtype)                 # (M, dh)
        wo_h = wo[lo:hi, :]                                    # (dh, dim) sublane-aligned

        # Contract dh axes directly; no transpose of K needed.
        dots = lax.dot_general(
            q_h, k_h, (((1,), (1,)), ((), ())),
            preferred_element_type=jnp.float32) * scale        # (N, M) f32

        # Numerically stable softmax, all in f32.
        dots = dots - jnp.max(dots, axis=-1, keepdims=True)
        e = jnp.exp(dots)
        denom = jnp.sum(e, axis=-1, keepdims=True)             # (N, 1)

        out_h = jnp.dot(e.astype(matmul_dtype), v_h,
                        preferred_element_type=jnp.float32)    # (N, dh)
        # Fold 1/sum in as a row scale after the matmul (EUP reciprocal).
        out_h = out_h * pl.reciprocal(denom, approx=True)

        # Project this head straight into the output accumulator — avoids the
        # lane-unaligned concat of per-head outputs.
        acc = acc + jnp.dot(out_h.astype(matmul_dtype), wo_h,
                            preferred_element_type=jnp.float32)  # (N, dim)

    # Single bias add + single write to o_ref per batch step.
    o_ref[0] = (acc + bo).astype(o_ref.dtype)


def cross_attention(x, bm_map, w_q, w_kv, w_out, b_out, *, heads, dim_head,
                    matmul_dtype=jnp.float32):
    """x: (B, N, dim), bm_map: (B, M, dim).
    w_q: (dim, inner_dim), w_kv: (dim, 2*inner_dim), w_out: (inner_dim, dim),
    b_out: (1, dim).  Matches PyTorch Cross_Attention.forward with dropout=0."""
    B, N, dim = x.shape
    _, M, _ = bm_map.shape
    inner_dim = heads * dim_head
    # locality=True: scale = exp(log(dim_head ** -0.5)) == dim_head ** -0.5
    scale = float(dim_head) ** -0.5

    # Split fused KV weight outside the kernel (avoids non-lane-aligned
    # in-kernel slicing of a (dim, 2*inner_dim) operand).
    w_k = w_kv[:, :inner_dim]
    w_v = w_kv[:, inner_dim:]

    kernel = functools.partial(
        _cross_attention_kernel,
        heads=heads, dim_head=dim_head, scale=scale, matmul_dtype=matmul_dtype)

    return pl.pallas_call(
        kernel,
        out_shape=jax.ShapeDtypeStruct((B, N, dim), jnp.float32),
        grid_spec=pltpu.PrefetchScalarGridSpec(
            num_scalar_prefetch=0,
            grid=(B,),
            in_specs=[
                pl.BlockSpec((1, N, dim), lambda b: (b, 0, 0)),        # x
                pl.BlockSpec((1, M, dim), lambda b: (b, 0, 0)),        # BM_map
                # Weights: grid-invariant block index -> fetched once,
                # stay VMEM-resident across all batch steps.
                pl.BlockSpec((dim, inner_dim), lambda b: (0, 0)),      # Wq
                pl.BlockSpec((dim, inner_dim), lambda b: (0, 0)),      # Wk
                pl.BlockSpec((dim, inner_dim), lambda b: (0, 0)),      # Wv
                pl.BlockSpec((inner_dim, dim), lambda b: (0, 0)),      # Wo
                pl.BlockSpec((1, dim), lambda b: (0, 0)),              # bias
            ],
            out_specs=pl.BlockSpec((1, N, dim), lambda b: (b, 0, 0)),
        ),
        compiler_params=pltpu.CompilerParams(
            dimension_semantics=("parallel",)),
    )(x, bm_map, w_q, w_k, w_v, w_out, b_out)


def _reference(x, bm, w_q, w_kv, w_out, b_out, heads, dim_head):
    inner_dim = heads * dim_head
    q = x @ w_q                                                # (B, N, inner)
    kv = bm @ w_kv                                             # (B, M, 2*inner)
    k, v = kv[..., :inner_dim], kv[..., inner_dim:]

    def split_heads(t):
        B, S, _ = t.shape
        return t.reshape(B, S, heads, dim_head).transpose(0, 2, 1, 3)

    qh, kh, vh = split_heads(q), split_heads(k), split_heads(v)
    dots = jnp.einsum('bhik,bhjk->bhij', qh, kh) * (dim_head ** -0.5)
    attn = jax.nn.softmax(dots, axis=-1)
    out = jnp.einsum('bhij,bhjk->bhik', attn, vh)              # (B, H, N, dh)
    B, H, N, dh = out.shape
    out = out.transpose(0, 2, 1, 3).reshape(B, N, H * dh)      # (B, N, inner)
    return out @ w_out + b_out[0]


if __name__ == "__main__":
    # Small shapes consistent with the module's forward:
    #   x: (B, N, dim), BM_map: (B, M, dim)
    B, N, M = 2, 8, 8
    dim, heads, dim_head = 32, 2, 16
    inner_dim = heads * dim_head

    key = jax.random.PRNGKey(0)
    kx, kbm, kq, kkv, ko, kb = jax.random.split(key, 6)

    x = jax.random.normal(kx, (B, N, dim), dtype=jnp.float32)
    bm_map = jax.random.normal(kbm, (B, M, dim), dtype=jnp.float32)

    # Parameter shapes matching __init__:
    #   to_q:  dim -> inner_dim (no bias); to_kv: dim -> 2*inner_dim (no bias);
    #   to_out: inner_dim -> dim (with bias).   Stored as x @ W layouts.
    w_q = jax.random.normal(kq, (dim, inner_dim), dtype=jnp.float32) * 0.05
    w_kv = jax.random.normal(kkv, (dim, 2 * inner_dim), dtype=jnp.float32) * 0.05
    w_out = jax.random.normal(ko, (inner_dim, dim), dtype=jnp.float32) * 0.05
    b_out = jax.random.normal(kb, (1, dim), dtype=jnp.float32) * 0.05

    out = cross_attention(x, bm_map, w_q, w_kv, w_out, b_out,
                          heads=heads, dim_head=dim_head)
    out = jax.block_until_ready(out)

    ref = _reference(x, bm_map, w_q, w_kv, w_out, b_out, heads, dim_head)
    assert out.shape == (B, N, dim)
    # Tolerance accounts for the approximate EUP reciprocal in the softmax.
    assert jnp.allclose(out, ref, atol=1e-3, rtol=1e-3), (
        float(jnp.max(jnp.abs(out - ref))))

    print("KERNEL_OK")
</pallas_src>

<mosaic_0001>
module attributes {stable_mosaic.version = 11 : i64} {
  func.func @_cross_attention_kernel(%arg0: i32, %arg1: memref<1x8x32xf32, #tpu.memory_space<vmem>>, %arg2: memref<1x8x32xf32, #tpu.memory_space<vmem>>, %arg3: memref<32x32xf32, #tpu.memory_space<vmem>>, %arg4: memref<32x32xf32, #tpu.memory_space<vmem>>, %arg5: memref<32x32xf32, #tpu.memory_space<vmem>>, %arg6: memref<32x32xf32, #tpu.memory_space<vmem>>, %arg7: memref<1x32xf32, #tpu.memory_space<vmem>>, %arg8: memref<1x8x32xf32, #tpu.memory_space<vmem>>) attributes {dimension_semantics = [#tpu.dimension_semantics<parallel>], iteration_bounds = array<i64: 2>, scalar_prefetch = 0 : i64, scratch_operands = 0 : i64, tpu.core_type = #tpu.core_type<tc>, window_params = [{transform_indices = @transform_0, window_bounds = array<i64: 1, 8, 32>}, {transform_indices = @transform_1, window_bounds = array<i64: 1, 8, 32>}, {pipeline_mode = #tpu.pipeline_mode<synchronous>, transform_indices = @transform_2, window_bounds = array<i64: 32, 32>}, {pipeline_mode = #tpu.pipeline_mode<synchronous>, transform_indices = @transform_3, window_bounds = array<i64: 32, 32>}, {pipeline_mode = #tpu.pipeline_mode<synchronous>, transform_indices = @transform_4, window_bounds = array<i64: 32, 32>}, {pipeline_mode = #tpu.pipeline_mode<synchronous>, transform_indices = @transform_5, window_bounds = array<i64: 32, 32>}, {pipeline_mode = #tpu.pipeline_mode<synchronous>, transform_indices = @transform_6, window_bounds = array<i64: 1, 32>}, {transform_indices = @transform_7, window_bounds = array<i64: 1, 8, 32>}]} {
    %c0 = arith.constant 0 : index
    %c0_0 = arith.constant 0 : index
    %c0_1 = arith.constant 0 : index
    %0 = vector.load %arg1[%c0, %c0_0, %c0_1] : memref<1x8x32xf32, #tpu.memory_space<vmem>>, vector<1x8x32xf32>
    %1 = vector.shape_cast %0 : vector<1x8x32xf32> to vector<8x32xf32>
    %c0_2 = arith.constant 0 : index
    %c0_3 = arith.constant 0 : index
    %c0_4 = arith.constant 0 : index
    %2 = vector.load %arg2[%c0_2, %c0_3, %c0_4] : memref<1x8x32xf32, #tpu.memory_space<vmem>>, vector<1x8x32xf32>
    %3 = vector.shape_cast %2 : vector<1x8x32xf32> to vector<8x32xf32>
    %c0_5 = arith.constant 0 : index
    %c0_6 = arith.constant 0 : index
    %4 = vector.load %arg3[%c0_5, %c0_6] : memref<32x32xf32, #tpu.memory_space<vmem>>, vector<32x32xf32>
    %c0_7 = arith.constant 0 : index
    %c0_8 = arith.constant 0 : index
    %5 = vector.load %arg4[%c0_7, %c0_8] : memref<32x32xf32, #tpu.memory_space<vmem>>, vector<32x32xf32>
    %c0_9 = arith.constant 0 : index
    %c0_10 = arith.constant 0 : index
    %6 = vector.load %arg5[%c0_9, %c0_10] : memref<32x32xf32, #tpu.memory_space<vmem>>, vector<32x32xf32>
    %c0_11 = arith.constant 0 : index
    %c0_12 = arith.constant 0 : index
    %7 = vector.load %arg6[%c0_11, %c0_12] : memref<32x32xf32, #tpu.memory_space<vmem>>, vector<32x32xf32>
    %c0_13 = arith.constant 0 : index
    %c0_14 = arith.constant 0 : index
    %8 = vector.load %arg7[%c0_13, %c0_14] : memref<1x32xf32, #tpu.memory_space<vmem>>, vector<1x32xf32>
    %cst = arith.constant dense<0.000000e+00> : vector<8x32xf32>
    %9 = tpu.matmul %1, %4, %cst {dimension_numbers = #tpu.dot_dimension_numbers<[1], [0], [0], [1], [0, 0, 1, 1], [], []>} : vector<8x32xf32>, vector<32x32xf32>, vector<8x32xf32> -> vector<8x32xf32>
    %cst_15 = arith.constant dense<0.000000e+00> : vector<8x32xf32>
    %10 = tpu.matmul %3, %5, %cst_15 {dimension_numbers = #tpu.dot_dimension_numbers<[1], [0], [0], [1], [0, 0, 1, 1], [], []>} : vector<8x32xf32>, vector<32x32xf32>, vector<8x32xf32> -> vector<8x32xf32>
    %cst_16 = arith.constant dense<0.000000e+00> : vector<8x32xf32>
    %11 = tpu.matmul %3, %6, %cst_16 {dimension_numbers = #tpu.dot_dimension_numbers<[1], [0], [0], [1], [0, 0, 1, 1], [], []>} : vector<8x32xf32>, vector<32x32xf32>, vector<8x32xf32> -> vector<8x32xf32>
    %cst_17 = arith.constant 0.000000e+00 : f32
    %12 = vector.broadcast %cst_17 : f32 to vector<8x32xf32>
    %13 = vector.extract_strided_slice %9 {offsets = [0, 0], sizes = [8, 16], strides = [1, 1]} : vector<8x32xf32> to vector<8x16xf32>
    %14 = vector.extract_strided_slice %10 {offsets = [0, 0], sizes = [8, 16], strides = [1, 1]} : vector<8x32xf32> to vector<8x16xf32>
    %15 = vector.extract_strided_slice %11 {offsets = [0, 0], sizes = [8, 16], strides = [1, 1]} : vector<8x32xf32> to vector<8x16xf32>
    %16 = vector.extract_strided_slice %7 {offsets = [0, 0], sizes = [16, 32], strides = [1, 1]} : vector<32x32xf32> to vector<16x32xf32>
    %cst_18 = arith.constant dense<0.000000e+00> : vector<8x8xf32>
    %17 = tpu.matmul %13, %14, %cst_18 {dimension_numbers = #tpu.dot_dimension_numbers<[1], [1], [0], [0], [0, 0, 1, 0], [], []>} : vector<8x16xf32>, vector<8x16xf32>, vector<8x8xf32> -> vector<8x8xf32>
    %cst_19 = arith.constant 2.500000e-01 : f32
    %18 = vector.broadcast %cst_19 : f32 to vector<8x8xf32>
    %19 = arith.mulf %17, %18 : vector<8x8xf32>
    %cst_20 = arith.constant dense<0xFF800000> : vector<8xf32>
    %20 = vector.multi_reduction <maximumf>, %19, %cst_20 [1] : vector<8x8xf32> to vector<8xf32>
    %21 = vector.shape_cast %20 : vector<8xf32> to vector<8x1xf32>
    %22 = vector.broadcast %21 : vector<8x1xf32> to vector<8x8xf32>
    %23 = arith.subf %19, %22 : vector<8x8xf32>
    %24 = math.exp %23 : vector<8x8xf32>
    %cst_21 = arith.constant dense<0.000000e+00> : vector<8xf32>
    %25 = vector.multi_reduction <add>, %24, %cst_21 [1] : vector<8x8xf32> to vector<8xf32>
    %26 = vector.shape_cast %25 : vector<8xf32> to vector<8x1xf32>
    %cst_22 = arith.constant dense<0.000000e+00> : vector<8x16xf32>
    %27 = tpu.matmul %24, %15, %cst_22 {dimension_numbers = #tpu.dot_dimension_numbers<[1], [0], [0], [1], [0, 0, 1, 1], [], []>} : vector<8x8xf32>, vector<8x16xf32>, vector<8x16xf32> -> vector<8x16xf32>
    %28 = tpu.reciprocal %26 {approx = true} : vector<8x1xf32> -> vector<8x1xf32>
    %29 = vector.broadcast %28 : vector<8x1xf32> to vector<8x16xf32>
    %30 = arith.mulf %27, %29 : vector<8x16xf32>
    %cst_23 = arith.constant dense<0.000000e+00> : vector<8x32xf32>
    %31 = tpu.matmul %30, %16, %cst_23 {dimension_numbers = #tpu.dot_dimension_numbers<[1], [0], [0], [1], [0, 0, 1, 1], [], []>} : vector<8x16xf32>, vector<16x32xf32>, vector<8x32xf32> -> vector<8x32xf32>
    %32 = arith.addf %12, %31 : vector<8x32xf32>
    %33 = vector.extract_strided_slice %9 {offsets = [0, 16], sizes = [8, 16], strides = [1, 1]} : vector<8x32xf32> to vector<8x16xf32>
    %34 = vector.extract_strided_slice %10 {offsets = [0, 16], sizes = [8, 16], strides = [1, 1]} : vector<8x32xf32> to vector<8x16xf32>
    %35 = vector.extract_strided_slice %11 {offsets = [0, 16], sizes = [8, 16], strides = [1, 1]} : vector<8x32xf32> to vector<8x16xf32>
    %36 = vector.extract_strided_slice %7 {offsets = [16, 0], sizes = [16, 32], strides = [1, 1]} : vector<32x32xf32> to vector<16x32xf32>
    %cst_24 = arith.constant dense<0.000000e+00> : vector<8x8xf32>
    %37 = tpu.matmul %33, %34, %cst_24 {dimension_numbers = #tpu.dot_dimension_numbers<[1], [1], [0], [0], [0, 0, 1, 0], [], []>} : vector<8x16xf32>, vector<8x16xf32>, vector<8x8xf32> -> vector<8x8xf32>
    %cst_25 = arith.constant 2.500000e-01 : f32
    %38 = vector.broadcast %cst_25 : f32 to vector<8x8xf32>
    %39 = arith.mulf %37, %38 : vector<8x8xf32>
    %cst_26 = arith.constant dense<0xFF800000> : vector<8xf32>
    %40 = vector.multi_reduction <maximumf>, %39, %cst_26 [1] : vector<8x8xf32> to vector<8xf32>
    %41 = vector.shape_cast %40 : vector<8xf32> to vector<8x1xf32>
    %42 = vector.broadcast %41 : vector<8x1xf32> to vector<8x8xf32>
    %43 = arith.subf %39, %42 : vector<8x8xf32>
    %44 = math.exp %43 : vector<8x8xf32>
    %cst_27 = arith.constant dense<0.000000e+00> : vector<8xf32>
    %45 = vector.multi_reduction <add>, %44, %cst_27 [1] : vector<8x8xf32> to vector<8xf32>
    %46 = vector.shape_cast %45 : vector<8xf32> to vector<8x1xf32>
    %cst_28 = arith.constant dense<0.000000e+00> : vector<8x16xf32>
    %47 = tpu.matmul %44, %35, %cst_28 {dimension_numbers = #tpu.dot_dimension_numbers<[1], [0], [0], [1], [0, 0, 1, 1], [], []>} : vector<8x8xf32>, vector<8x16xf32>, vector<8x16xf32> -> vector<8x16xf32>
    %48 = tpu.reciprocal %46 {approx = true} : vector<8x1xf32> -> vector<8x1xf32>
    %49 = vector.broadcast %48 : vector<8x1xf32> to vector<8x16xf32>
    %50 = arith.mulf %47, %49 : vector<8x16xf32>
    %cst_29 = arith.constant dense<0.000000e+00> : vector<8x32xf32>
    %51 = tpu.matmul %50, %36, %cst_29 {dimension_numbers = #tpu.dot_dimension_numbers<[1], [0], [0], [1], [0, 0, 1, 1], [], []>} : vector<8x16xf32>, vector<16x32xf32>, vector<8x32xf32> -> vector<8x32xf32>
    %52 = arith.addf %32, %51 : vector<8x32xf32>
    %53 = vector.broadcast %8 : vector<1x32xf32> to vector<8x32xf32>
    %54 = arith.addf %52, %53 : vector<8x32xf32>
    %c0_30 = arith.constant 0 : index
    %c0_31 = arith.constant 0 : index
    %c0_32 = arith.constant 0 : index
    %55 = vector.load %arg8[%c0_30, %c0_31, %c0_32] : memref<1x8x32xf32, #tpu.memory_space<vmem>>, vector<1x8x32xf32>
    %56 = vector.shape_cast %55 : vector<1x8x32xf32> to vector<8x32xf32>
    %57 = vector.shape_cast %54 : vector<8x32xf32> to vector<1x8x32xf32>
    tpu.vector_store %arg8[%c0_30, %c0_31, %c0_32], %57 {strides = array<i32>} : memref<1x8x32xf32, #tpu.memory_space<vmem>>, vector<1x8x32xf32>,
    return
  }
  func.func @transform_0(%arg0: i32) -> (i32, i32, i32) {
    %c0_i32 = arith.constant 0 : i32
    %c0_i32_0 = arith.constant 0 : i32
    %c0_i32_1 = arith.constant 0 : i32
    return %arg0, %c0_i32, %c0_i32_0 : i32, i32, i32
  }
  func.func @transform_1(%arg0: i32) -> (i32, i32, i32) {
    %c0_i32 = arith.constant 0 : i32
    %c0_i32_0 = arith.constant 0 : i32
    %c0_i32_1 = arith.constant 0 : i32
    return %arg0, %c0_i32, %c0_i32_0 : i32, i32, i32
  }
  func.func @transform_2(%arg0: i32) -> (i32, i32) {
    %c0_i32 = arith.constant 0 : i32
    %c0_i32_0 = arith.constant 0 : i32
    %c0_i32_1 = arith.constant 0 : i32
    return %c0_i32, %c0_i32_0 : i32, i32
  }
  func.func @transform_3(%arg0: i32) -> (i32, i32) {
    %c0_i32 = arith.constant 0 : i32
    %c0_i32_0 = arith.constant 0 : i32
    %c0_i32_1 = arith.constant 0 : i32
    return %c0_i32, %c0_i32_0 : i32, i32
  }
  func.func @transform_4(%arg0: i32) -> (i32, i32) {
    %c0_i32 = arith.constant 0 : i32
    %c0_i32_0 = arith.constant 0 : i32
    %c0_i32_1 = arith.constant 0 : i32
    return %c0_i32, %c0_i32_0 : i32, i32
  }
  func.func @transform_5(%arg0: i32) -> (i32, i32) {
    %c0_i32 = arith.constant 0 : i32
    %c0_i32_0 = arith.constant 0 : i32
    %c0_i32_1 = arith.constant 0 : i32
    return %c0_i32, %c0_i32_0 : i32, i32
  }
  func.func @transform_6(%arg0: i32) -> (i32, i32) {
    %c0_i32 = arith.constant 0 : i32
    %c0_i32_0 = arith.constant 0 : i32
    %c0_i32_1 = arith.constant 0 : i32
    return %c0_i32, %c0_i32_0 : i32, i32
  }
  func.func @transform_7(%arg0: i32) -> (i32, i32, i32) {
    %c0_i32 = arith.constant 0 : i32
    %c0_i32_0 = arith.constant 0 : i32
    %c0_i32_1 = arith.constant 0 : i32
    return %arg0, %c0_i32, %c0_i32_0 : i32, i32, i32
  }
}

</mosaic_0001>

<llo_original>
// kernel: tpu_custom_call.1
$region0: #{tpu_custom_call.1}
  #allocation0 [shape = 'u32[]', space=smem, size = 0x4, offset = 0x4, fixed_abs, tag = 'smem constant byte address 0x4 - core index']
  #allocation1 [shape = 'u32[144,128]{1,0:T(1,128)}', space=vmem, size = 0x12000, scoped, tag = 'internal scratch']
  %s0 = inlined_call_operand.hbm [shape: f32[2,8,32], index: 0, kind: input, shape index: {}]
  %s1 = inlined_call_operand.hbm [shape: f32[2,8,32], index: 1, kind: input, shape index: {}]
  %s2 = inlined_call_operand.hbm [shape: f32[32,32], index: 2, kind: input, shape index: {}]
  %s3 = inlined_call_operand.hbm [shape: f32[32,32], index: 3, kind: input, shape index: {}]
  %s4 = inlined_call_operand.hbm [shape: f32[32,32], index: 4, kind: input, shape index: {}]
  %s5 = inlined_call_operand.hbm [shape: f32[32,32], index: 5, kind: input, shape index: {}]
  %s6 = inlined_call_operand.vmem [shape: f32[1,32], index: 6, kind: input, shape index: {}]
  %s7 = inlined_call_operand.hbm [shape: f32[2,8,32], index: 7, kind: output, shape index: {}]
  %s8 = sld [smem:[#allocation0]]
  $region85: #{tpu_custom_call.1} parent=0
    _
  %s10 = ssub.s32 1, %s8
  %s11 = scalar_select 0, %s10, %s8
  $region1: #{tpu_custom_call.1} parent=0
    #allocation2 [shape = 'u8[8192]{0}', space=vmem, size = 0x2000, scoped, tag = 'input window, operand 0']
    #allocation3 [shape = 's32[2]{0}', space=sflag, size = 0x8, scoped, tag = 'scoped memory for tpu_custom_call.1']
    #allocation4 [shape = 's32[2]{0}', space=sflag, size = 0x8, scoped, tag = 'scoped memory for tpu_custom_call.1']
    #allocation5 [shape = 'u8[8192]{0}', space=vmem, size = 0x2000, scoped, tag = 'input window, operand 1']
    #allocation6 [shape = 's32[2]{0}', space=sflag, size = 0x8, scoped, tag = 'scoped memory for tpu_custom_call.1']
    #allocation7 [shape = 'u8[16384]{0}', space=vmem, size = 0x4000, scoped, tag = 'input window, operand 2, single buffered']
    #allocation8 [shape = 'u8[16384]{0}', space=vmem, size = 0x4000, scoped, tag = 'input window, operand 3, single buffered']
    #allocation9 [shape = 's32[1]{0}', space=sflag, size = 0x4, scoped, tag = 'scoped memory for tpu_custom_call.1']
    #allocation10 [shape = 'u8[16384]{0}', space=vmem, size = 0x4000, scoped, tag = 'input window, operand 4, single buffered']
    #allocation11 [shape = 'u8[16384]{0}', space=vmem, size = 0x4000, scoped, tag = 'input window, operand 5, single buffered']
    #allocation12 [shape = 's32[1]{0}', space=sflag, size = 0x4, scoped, tag = 'scoped memory for tpu_custom_call.1']
    #allocation13 [shape = 'u8[8192]{0}', space=vmem, size = 0x2000, scoped, tag = 'output window, operand 0']
    %12 = vsyncpa [#allocation3], 0
    %s13 = scalar_lea.sflag [#allocation3], 1
    %14 = vsyncpa %s13, 0
    %15 = vsyncpa [#allocation6], 0
    %s16 = scalar_lea.sflag [#allocation6], 1
    %17 = vsyncpa %s16, 0
    %18 = vsyncpa [#allocation9], 0
    %19 = vsyncpa [#allocation12], 0
    %20 = vsyncpa [#allocation4], 0
    %s21 = scalar_lea.sflag [#allocation4], 1
    %22 = vsyncpa %s21, 0
    loop: start=0, step=1, limit=4
    $region2: #{tpu_custom_call.1} parent=1 // loop_pre_header
      _
    $region3: #{tpu_custom_call.1} parent=1 // loop_header
      %s24 = sphi 0, %s28
      %p25 = scmp.ge.s32.totalorder %s24, 4
      %s34 = sphi 0, %s36
      %s37 = sphi 0, %s34
      %s38 = sphi 0, %s37
      %s54 = sphi 0, %s38
      %s60 = sphi 0, %s62
      %s63 = sphi 0, %s60
      %s64 = sphi 0, %s63
      %s80 = sphi 0, %s64
      %s84 = sphi 0, %s84
      %s86 = sphi 0, %s84
      %s87 = sphi 0, %s86
      %s101 = sphi 0, %s87
      %s105 = sphi 0, %s105
      %s107 = sphi 0, %s105
      %s108 = sphi 0, %s107
      %s122 = sphi 0, %s108
      %s126 = sphi 0, %s126
      %s128 = sphi 0, %s126
      %s129 = sphi 0, %s128
      %s143 = sphi 0, %s129
      %s147 = sphi 0, %s147
      %s149 = sphi 0, %s147
      %s150 = sphi 0, %s149
      %s164 = sphi 0, %s150
      %s168 = sphi 0, %s168
      %s170 = sphi 0, %s168
      %s171 = sphi 0, %s170
      %s185 = sphi 0, %s171
      %s191 = sphi 0, %s193
      %s194 = sphi 0, %s191
      %s195 = sphi 0, %s194
      %s211 = sphi 0, %s195
    $region4: #{tpu_custom_call.1} parent=1 // loop_header_branch
      %27 = sbr.rel (%p25) target = $region8
    $region5: #{tpu_custom_call.1} parent=1 // loop_body
      %s29 = ssub.s32 %s24, 1
      %s30 = ssub.s32 %s24, 2
      %s31 = sadd.s32 %s24, 1
      %s32 = ssub.s32 %s24, %s31
      %p33 = scmp.eq.s32.totalorder %s32, 0
      %s35 = sadd.s32 %s34, 1
      %s36 = scalar_select %p33, %s34, %s35
      %p39 = pneg %p33
      %p40 = scmp.eq.s32.totalorder %s24, 1
      %p41 = por %p39, %p40
      %p42 = scmp.ne.s32.totalorder %s34, %s37
      %p43 = scmp.eq.s32.totalorder %s24, 0
      %p44 = por %p42, %p43
      %p45 = scmp.ne.s32.totalorder %s34, %s37
      %p46 = scmp.eq.s32.totalorder %s29, 1
      %p47 = por %p45, %p46
      %p48 = scmp.ne.s32.totalorder %s37, %s38
      %p49 = scmp.eq.s32.totalorder %s29, 0
      %p50 = por %p48, %p49
      %p51 = scmp.ne.s32.totalorder %s37, %s38
      %p52 = scmp.eq.s32.totalorder %s30, 1
      %p53 = por %p51, %p52
      %p55 = scmp.ne.s32.totalorder %s38, %s54
      %p56 = scmp.eq.s32.totalorder %s30, 0
      %p57 = por %p55, %p56
      %s58 = ssub.s32 %s24, %s31
      %p59 = scmp.eq.s32.totalorder %s58, 0
      %s61 = sadd.s32 %s60, 1
      %s62 = scalar_select %p59, %s60, %s61
      %p65 = pneg %p59
      %p66 = scmp.eq.s32.totalorder %s24, 1
      %p67 = por %p65, %p66
      %p68 = scmp.ne.s32.totalorder %s60, %s63
      %p69 = scmp.eq.s32.totalorder %s24, 0
      %p70 = por %p68, %p69
      %p71 = scmp.ne.s32.totalorder %s60, %s63
      %p72 = scmp.eq.s32.totalorder %s29, 1
      %p73 = por %p71, %p72
      %p74 = scmp.ne.s32.totalorder %s63, %s64
      %p75 = scmp.eq.s32.totalorder %s29, 0
      %p76 = por %p74, %p75
      %p77 = scmp.ne.s32.totalorder %s63, %s64
      %p78 = scmp.eq.s32.totalorder %s30, 1
      %p79 = por %p77, %p78
      %p81 = scmp.ne.s32.totalorder %s64, %s80
      %p82 = scmp.eq.s32.totalorder %s30, 0
      %p83 = por %p81, %p82
      %s85 = sadd.s32 %s84, 1
      %p88 = scmp.eq.s32.totalorder %s24, 1
      %p89 = scmp.ne.s32.totalorder %s84, %s86
      %p90 = scmp.eq.s32.totalorder %s24, 0
      %p91 = por %p89, %p90
      %p92 = scmp.ne.s32.totalorder %s84, %s86
      %p93 = scmp.eq.s32.totalorder %s29, 1
      %p94 = por %p92, %p93
      %p95 = scmp.ne.s32.totalorder %s86, %s87
      %p96 = scmp.eq.s32.totalorder %s29, 0
      %p97 = por %p95, %p96
      %p98 = scmp.ne.s32.totalorder %s86, %s87
      %p99 = scmp.eq.s32.totalorder %s30, 1
      %p100 = por %p98, %p99
      %p102 = scmp.ne.s32.totalorder %s87, %s101
      %p103 = scmp.eq.s32.totalorder %s30, 0
      %p104 = por %p102, %p103
      %s106 = sadd.s32 %s105, 1
      %p109 = scmp.eq.s32.totalorder %s24, 1
      %p110 = scmp.ne.s32.totalorder %s105, %s107
      %p111 = scmp.eq.s32.totalorder %s24, 0
      %p112 = por %p110, %p111
      %p113 = scmp.ne.s32.totalorder %s105, %s107
      %p114 = scmp.eq.s32.totalorder %s29, 1
      %p115 = por %p113, %p114
      %p116 = scmp.ne.s32.totalorder %s107, %s108
      %p117 = scmp.eq.s32.totalorder %s29, 0
      %p118 = por %p116, %p117
      %p119 = scmp.ne.s32.totalorder %s107, %s108
      %p120 = scmp.eq.s32.totalorder %s30, 1
      %p121 = por %p119, %p120
      %p123 = scmp.ne.s32.totalorder %s108, %s122
      %p124 = scmp.eq.s32.totalorder %s30, 0
      %p125 = por %p123, %p124
      %s127 = sadd.s32 %s126, 1
      %p130 = scmp.eq.s32.totalorder %s24, 1
      %p131 = scmp.ne.s32.totalorder %s126, %s128
      %p132 = scmp.eq.s32.totalorder %s24, 0
      %p133 = por %p131, %p132
      %p134 = scmp.ne.s32.totalorder %s126, %s128
      %p135 = scmp.eq.s32.totalorder %s29, 1
      %p136 = por %p134, %p135
      %p137 = scmp.ne.s32.totalorder %s128, %s129
      %p138 = scmp.eq.s32.totalorder %s29, 0
      %p139 = por %p137, %p138
      %p140 = scmp.ne.s32.totalorder %s128, %s129
      %p141 = scmp.eq.s32.totalorder %s30, 1
      %p142 = por %p140, %p141
      %p144 = scmp.ne.s32.totalorder %s129, %s143
      %p145 = scmp.eq.s32.totalorder %s30, 0
      %p146 = por %p144, %p145
      %s148 = sadd.s32 %s147, 1
      %p151 = scmp.eq.s32.totalorder %s24, 1
      %p152 = scmp.ne.s32.totalorder %s147, %s149
      %p153 = scmp.eq.s32.totalorder %s24, 0
      %p154 = por %p152, %p153
      %p155 = scmp.ne.s32.totalorder %s147, %s149
      %p156 = scmp.eq.s32.totalorder %s29, 1
      %p157 = por %p155, %p156
      %p158 = scmp.ne.s32.totalorder %s149, %s150
      %p159 = scmp.eq.s32.totalorder %s29, 0
      %p160 = por %p158, %p159
      %p161 = scmp.ne.s32.totalorder %s149, %s150
      %p162 = scmp.eq.s32.totalorder %s30, 1
      %p163 = por %p161, %p162
      %p165 = scmp.ne.s32.totalorder %s150, %s164
      %p166 = scmp.eq.s32.totalorder %s30, 0
      %p167 = por %p165, %p166
      %s169 = sadd.s32 %s168, 1
      %p172 = scmp.eq.s32.totalorder %s24, 1
      %p173 = scmp.ne.s32.totalorder %s168, %s170
      %p174 = scmp.eq.s32.totalorder %s24, 0
      %p175 = por %p173, %p174
      %p176 = scmp.ne.s32.totalorder %s168, %s170
      %p177 = scmp.eq.s32.totalorder %s29, 1
      %p178 = por %p176, %p177
      %p179 = scmp.ne.s32.totalorder %s170, %s171
      %p180 = scmp.eq.s32.totalorder %s29, 0
      %p181 = por %p179, %p180
      %p182 = scmp.ne.s32.totalorder %s170, %s171
      %p183 = scmp.eq.s32.totalorder %s30, 1
      %p184 = por %p182, %p183
      %p186 = scmp.ne.s32.totalorder %s171, %s185
      %p187 = scmp.eq.s32.totalorder %s30, 0
      %p188 = por %p186, %p187
      %s189 = ssub.s32 %s24, %s31
      %p190 = scmp.eq.s32.totalorder %s189, 0
      %s192 = sadd.s32 %s191, 1
      %s193 = scalar_select %p190, %s191, %s192
      %p196 = pneg %p190
      %p197 = scmp.eq.s32.totalorder %s24, 1
      %p198 = por %p196, %p197
      %p199 = scmp.ne.s32.totalorder %s191, %s194
      %p200 = scmp.eq.s32.totalorder %s24, 0
      %p201 = por %p199, %p200
      %p202 = scmp.ne.s32.totalorder %s191, %s194
      %p203 = scmp.eq.s32.totalorder %s29, 1
      %p204 = por %p202, %p203
      %p205 = scmp.ne.s32.totalorder %s194, %s195
      %p206 = scmp.eq.s32.totalorder %s29, 0
      %p207 = por %p205, %p206
      %p208 = scmp.ne.s32.totalorder %s194, %s195
      %p209 = scmp.eq.s32.totalorder %s30, 1
      %p210 = por %p208, %p209
      %p212 = scmp.ne.s32.totalorder %s195, %s211
      %p213 = scmp.eq.s32.totalorder %s30, 0
      %p214 = por %p212, %p213
      %p215 = scmp.le.s32.totalorder 1, %s24
      %p216 = scmp.lt.s32.totalorder %s24, 3
      %p217 = pnand %p215, %p216
      %p218 = pneg %p217
      // Predicated region
      $region9: #{tpu_custom_call.1} parent=5 // pred_check
        _
      $region10: #{tpu_custom_call.1} parent=5 // pred_check_branch
        %220 = sbr.rel (%p217) target = $region12
      $region11: #{tpu_custom_call.1} parent=5 // pred_region
        %s221 = ssub.s32 %s24, 1
        // Predicated region
        $region13: #{tpu_custom_call.1} parent=11 // pred_check
          %p222 = pneg %p97
        $region14: #{tpu_custom_call.1} parent=11 // pred_check_branch
          %224 = sbr.rel (%p222) target = $region16
        $region15: #{tpu_custom_call.1} parent=11 // pred_region
          %s226 = ssub.s32 512, 512
          %227 = vsyncadd [#allocation6], %s226
          %s228 = sshll.u32 [#allocation7], 4
          %s229 = int_to_ptr.vmem [resolvable:$true] %s228
          %234 = dma.hbm_to_vmem [thread:$0]  %s2, 512, %s229, [#allocation6], 128, 128, 8
        $region16: #{tpu_custom_call.1} parent=11 // pred_fallthru
          _
        // Predicated region
        $region17: #{tpu_custom_call.1} parent=11 // pred_check
          %p235 = pneg %p118
        $region18: #{tpu_custom_call.1} parent=11 // pred_check_branch
          %237 = sbr.rel (%p235) target = $region20
        $region19: #{tpu_custom_call.1} parent=11 // pred_region
          %s239 = ssub.s32 512, 512
          %240 = vsyncadd [#allocation9], %s239
          %s241 = sshll.u32 [#allocation8], 4
          %s242 = int_to_ptr.vmem [resolvable:$true] %s241
          %247 = dma.hbm_to_vmem [thread:$0]  %s3, 512, %s242, [#allocation9], 128, 128, 8
        $region20: #{tpu_custom_call.1} parent=11 // pred_fallthru
          _
        // Predicated region
        $region21: #{tpu_custom_call.1} parent=11 // pred_check
          %p248 = pneg %p139
        $region22: #{tpu_custom_call.1} parent=11 // pred_check_branch
          %250 = sbr.rel (%p248) target = $region24
        $region23: #{tpu_custom_call.1} parent=11 // pred_region
          %s252 = ssub.s32 512, 512
          %253 = vsyncadd [#allocation9], %s252
          %s254 = sshll.u32 [#allocation10], 4
          %s255 = int_to_ptr.vmem [resolvable:$true] %s254
          %260 = dma.hbm_to_vmem [thread:$0]  %s4, 512, %s255, [#allocation9], 128, 128, 8
        $region24: #{tpu_custom_call.1} parent=11 // pred_fallthru
          _
        // Predicated region
        $region25: #{tpu_custom_call.1} parent=11 // pred_check
          %p261 = pneg %p160
        $region26: #{tpu_custom_call.1} parent=11 // pred_check_branch
          %263 = sbr.rel (%p261) target = $region28
        $region27: #{tpu_custom_call.1} parent=11 // pred_region
          %s265 = ssub.s32 512, 512
          %266 = vsyncadd [#allocation12], %s265
          %s267 = sshll.u32 [#allocation11], 4
          %s268 = int_to_ptr.vmem [resolvable:$true] %s267
          %273 = dma.hbm_to_vmem [thread:$0]  %s5, 512, %s268, [#allocation12], 128, 128, 8
        $region28: #{tpu_custom_call.1} parent=11 // pred_fallthru
          _
        // Predicated region
        $region29: #{tpu_custom_call.1} parent=11 // pred_check
          %p274 = pneg %p181
        $region30: #{tpu_custom_call.1} parent=11 // pred_check_branch
          %276 = sbr.rel (%p274) target = $region32
        $region31: #{tpu_custom_call.1} parent=11 // pred_region
          _
        $region32: #{tpu_custom_call.1} parent=11 // pred_fallthru
          _
      $region12: #{tpu_custom_call.1} parent=5 // pred_fallthru
        _
      %p277 = scmp.lt.s32.totalorder %s24, 2
      // Predicated region
      $region33: #{tpu_custom_call.1} parent=5 // pred_check
        %p278 = pneg %p277
      $region34: #{tpu_custom_call.1} parent=5 // pred_check_branch
        %280 = sbr.rel (%p278) target = $region36
      $region35: #{tpu_custom_call.1} parent=5 // pred_region
        // Predicated region
        $region37: #{tpu_custom_call.1} parent=35 // pred_check
          %p281 = pneg %p44
        $region38: #{tpu_custom_call.1} parent=35 // pred_check_branch
          %283 = sbr.rel (%p281) target = $region40
        $region39: #{tpu_custom_call.1} parent=35 // pred_region
          %s284 = sand.u32 %s34, 1
          %s285 = scalar_lea.sflag [#allocation3], %s284
          %s286 = sand.u32 %s34, 1
          %s287 = smul.addr %s286, 8
          %s288 = scalar_lea.vmem [#allocation2], %s287
          %s290 = ssub.s32 128, 128
          %291 = vsyncadd %s285, %s290
          %s292 = smul.addr %s24, 128
          %s293 = scalar_lea.hbm %s0, %s292
          %s295 = sshll.u32 %s288, 4
          %s296 = int_to_ptr.vmem [resolvable:$true] %s295
          %298 = dma.hbm_to_vmem [thread:$0]  %s293, 128, %s296, %s285
        $region40: #{tpu_custom_call.1} parent=35 // pred_fallthru
          _
        // Predicated region
        $region41: #{tpu_custom_call.1} parent=35 // pred_check
          %p299 = pneg %p70
        $region42: #{tpu_custom_call.1} parent=35 // pred_check_branch
          %301 = sbr.rel (%p299) target = $region44
        $region43: #{tpu_custom_call.1} parent=35 // pred_region
          %s302 = sand.u32 %s24, 1
          %s303 = scalar_lea.sflag [#allocation6], %s302
          %s304 = sand.u32 %s60, 1
          %s305 = smul.addr %s304, 8
          %s306 = scalar_lea.vmem [#allocation5], %s305
          %s308 = ssub.s32 128, 128
          %309 = vsyncadd %s303, %s308
          %s310 = smul.addr %s24, 128
          %s311 = scalar_lea.hbm %s1, %s310
          %s313 = sshll.u32 %s306, 4
          %s314 = int_to_ptr.vmem [resolvable:$true] %s313
          %316 = dma.hbm_to_vmem [thread:$0]  %s311, 128, %s314, %s303
        $region44: #{tpu_custom_call.1} parent=35 // pred_fallthru
          _
      $region36: #{tpu_custom_call.1} parent=5 // pred_fallthru
        _
      %p317 = scmp.le.s32.totalorder 1, %s24
      %p318 = scmp.lt.s32.totalorder %s24, 3
      %p319 = pnand %p317, %p318
      %p320 = pneg %p319
      // Predicated region
      $region45: #{tpu_custom_call.1} parent=5 // pred_check
        _
      $region46: #{tpu_custom_call.1} parent=5 // pred_check_branch
        %322 = sbr.rel (%p319) target = $region48
      $region47: #{tpu_custom_call.1} parent=5 // pred_region
        %s323 = ssub.s32 %s24, 1
        %s324 = sand.u32 %s37, 1
        %s325 = scalar_lea.sflag [#allocation3], %s324
        %s326 = sand.u32 %s37, 1
        %s327 = smul.addr %s326, 8
        %s328 = scalar_lea.vmem [#allocation2], %s327
        // Predicated region
        $region49: #{tpu_custom_call.1} parent=47 // pred_check
          %p329 = pneg %p50
        $region50: #{tpu_custom_call.1} parent=47 // pred_check_branch
          %331 = sbr.rel (%p329) target = $region52
        $region51: #{tpu_custom_call.1} parent=47 // pred_region
          %332 = dma.done %s325, 128
        $region52: #{tpu_custom_call.1} parent=47 // pred_fallthru
          _
        %s333 = sand.u32 %s29, 1
        %s334 = scalar_lea.sflag [#allocation6], %s333
        %s335 = sand.u32 %s63, 1
        %s336 = smul.addr %s335, 8
        %s337 = scalar_lea.vmem [#allocation5], %s336
        // Predicated region
        $region53: #{tpu_custom_call.1} parent=47 // pred_check
          %p338 = pneg %p76
        $region54: #{tpu_custom_call.1} parent=47 // pred_check_branch
          %340 = sbr.rel (%p338) target = $region56
        $region55: #{tpu_custom_call.1} parent=47 // pred_region
          %341 = dma.done %s334, 128
        $region56: #{tpu_custom_call.1} parent=47 // pred_fallthru
          _
        // Predicated region
        $region57: #{tpu_custom_call.1} parent=47 // pred_check
          %p342 = pneg %p97
        $region58: #{tpu_custom_call.1} parent=47 // pred_check_branch
          %344 = sbr.rel (%p342) target = $region60
        $region59: #{tpu_custom_call.1} parent=47 // pred_region
          %345 = dma.done [#allocation6], 512
        $region60: #{tpu_custom_call.1} parent=47 // pred_fallthru
          _
        // Predicated region
        $region61: #{tpu_custom_call.1} parent=47 // pred_check
          %p346 = pneg %p118
        $region62: #{tpu_custom_call.1} parent=47 // pred_check_branch
          %348 = sbr.rel (%p346) target = $region64
        $region63: #{tpu_custom_call.1} parent=47 // pred_region
          %349 = dma.done [#allocation9], 512
        $region64: #{tpu_custom_call.1} parent=47 // pred_fallthru
          _
        // Predicated region
        $region65: #{tpu_custom_call.1} parent=47 // pred_check
          %p350 = pneg %p139
        $region66: #{tpu_custom_call.1} parent=47 // pred_check_branch
          %352 = sbr.rel (%p350) target = $region68
        $region67: #{tpu_custom_call.1} parent=47 // pred_region
          %353 = dma.done [#allocation9], 512
        $region68: #{tpu_custom_call.1} parent=47 // pred_fallthru
          _
        // Predicated region
        $region69: #{tpu_custom_call.1} parent=47 // pred_check
          %p354 = pneg %p160
        $region70: #{tpu_custom_call.1} parent=47 // pred_check_branch
          %356 = sbr.rel (%p354) target = $region72
        $region71: #{tpu_custom_call.1} parent=47 // pred_region
          %357 = dma.done [#allocation12], 512
        $region72: #{tpu_custom_call.1} parent=47 // pred_fallthru
          _
        %s358 = sand.u32 %s37, 1
        %s359 = scalar_lea.sflag [#allocation3], %s358
        %s360 = sand.u32 %s37, 1
        %s361 = smul.addr %s360, 8
        %s362 = scalar_lea.vmem [#allocation2], %s361
        %p363 = pneg %p50
        %p364 = pneg %p47
        %s365 = sand.u32 %s29, 1
        %s366 = scalar_lea.sflag [#allocation6], %s365
        %s367 = sand.u32 %s63, 1
        %s368 = smul.addr %s367, 8
        %s369 = scalar_lea.vmem [#allocation5], %s368
        %p370 = pneg %p76
        %p371 = pneg %p73
        %p372 = pneg %p97
        %p373 = pneg %p94
        %p374 = pneg %p118
        %p375 = pneg %p115
        %p376 = pneg %p139
        %p377 = pneg %p136
        %p378 = pneg %p160
        %p379 = pneg %p157
        %p380 = pneg %p181
        %p381 = pneg %p178
        %p382 = pneg %p207
        %p383 = pneg %p204
        %s384 = sand.u32 %s194, 1
        %s385 = scalar_lea.sflag [#allocation4], %s384
        %s386 = sand.u32 %s194, 1
        %s387 = smul.addr %s386, 8
        %s388 = scalar_lea.vmem [#allocation13], %s387
        %v389 = vld [vmem:[%s328] sm:$0xff]
        %v390 = vld [vmem:[%s337] sm:$0xff]
        %v391 = vld [vmem:[#allocation7] sm:$0xff]
        %v392 = vld [vmem:[#allocation7 + $0x8] sm:$0xff]
        %v393 = vld [vmem:[#allocation7 + $0x10] sm:$0xff]
        %v394 = vld [vmem:[#allocation7 + $0x18] sm:$0xff]
        %v395 = vld [vmem:[#allocation8] sm:$0xff]
        %v396 = vld [vmem:[#allocation8 + $0x8] sm:$0xff]
        %v397 = vld [vmem:[#allocation8 + $0x10] sm:$0xff]
        %v398 = vld [vmem:[#allocation8 + $0x18] sm:$0xff]
        %v399 = vld [vmem:[#allocation10] sm:$0xff]
        %v400 = vld [vmem:[#allocation10 + $0x8] sm:$0xff]
        %v401 = vld [vmem:[#allocation10 + $0x10] sm:$0xff]
        %v402 = vld [vmem:[#allocation10 + $0x18] sm:$0xff]
        %v403 = vld [vmem:[#allocation11] sm:$0xff]
        %v404 = vld [vmem:[#allocation11 + $0x8] sm:$0xff]
        %v405 = vld [vmem:[#allocation11 + $0x10] sm:$0xff]
        %v406 = vld [vmem:[#allocation11 + $0x18] sm:$0xff]
        %v407 = vld [vmem:[%s6] sm:$0x1]
        %vm408 = vcmask 261120
        %v410 = vsel %vm408, %v389, 0
        %412 = vmatprep.subr.mxu0 0.0
        %413 = vmatpush1.msra.mxu0 %v391
        %414 = vmatprep.subr.mxu0 0.0
        %415 = vmatpush1.msra.mxu0 %v392
        %416 = vmatprep.subr.mxu0 0.0
        %417 = vmatpush1.msra.mxu0 %v393
        %418 = vmatprep.subr.mxu0 0.0
        %419 = vmatpush1.msra.mxu0 %v394
        %420 = vmatprep.subr.mxu0 0.0
        %421 = vmatpush1.msra.mxu0 0.0
        %422 = vmatprep.subr.mxu0 0.0
        %423 = vmatpush1.msra.mxu0 0.0
        %424 = vmatprep.subr.mxu0 0.0
        %425 = vmatpush1.msra.mxu0 0.0
        %426 = vmatprep.subr.mxu0 0.0
        %427 = vmatpush1.msra.mxu0 0.0
        %428 = vmatprep.subr.mxu0 0.0
        %429 = vmatpush1.msra.mxu0 0.0
        %430 = vmatprep.subr.mxu0 0.0
        %431 = vmatpush1.msra.mxu0 0.0
        %432 = vmatprep.subr.mxu0 0.0
        %433 = vmatpush1.msra.mxu0 0.0
        %434 = vmatprep.subr.mxu0 0.0
        %435 = vmatpush1.msra.mxu0 0.0
        %436 = vmatprep.subr.mxu0 0.0
        %437 = vmatpush1.msra.mxu0 0.0
        %438 = vmatprep.subr.mxu0 0.0
        %439 = vmatpush1.msra.mxu0 0.0
        %440 = vmatprep.subr.mxu0 0.0
        %441 = vmatpush1.msra.mxu0 0.0
        %442 = vmatprep.subr.mxu0 0.0
        %443 = vmatpush1.msra.mxu0 0.0
        %444 = vmatprep.subr.mxu0 0.0
        %445 = vmatpush1.msra.mxu0 0.0
        %446 = vmatprep.subr.mxu0 0.0
        %447 = vmatpush1.msra.mxu0 0.0
        %448 = vmatprep.subr.mxu0 0.0
        %449 = vmatpush1.msra.mxu0 0.0
        %450 = vmatprep.subr.mxu0 0.0
        %451 = vmatpush1.msra.mxu0 0.0
        %452 = vmatprep.subr.mxu0 0.0
        %453 = vmatpush1.msra.mxu0 0.0
        %454 = vmatprep.subr.mxu0 0.0
        %455 = vmatpush1.msra.mxu0 0.0
        %456 = vmatprep.subr.mxu0 0.0
        %457 = vmatpush1.msra.mxu0 0.0
        %458 = vmatprep.subr.mxu0 0.0
        %459 = vmatpush1.msra.mxu0 0.0
        %460 = vmatprep.subr.mxu0 0.0
        %461 = vmatpush1.msra.mxu0 0.0
        %462 = vmatprep.subr.mxu0 0.0
        %463 = vmatpush1.msra.mxu0 0.0
        %464 = vmatprep.subr.mxu0 0.0
        %465 = vmatpush1.msra.mxu0 0.0
        %466 = vmatprep.subr.mxu0 0.0
        %467 = vmatpush1.msra.mxu0 0.0
        %468 = vmatprep.subr.mxu0 0.0
        %469 = vmatpush1.msra.mxu0 0.0
        %470 = vmatprep.subr.mxu0 0.0
        %471 = vmatpush1.msra.mxu0 0.0
        %472 = vmatprep.subr.mxu0 0.0
        %473 = vmatpush1.msra.mxu0 0.0
        %474 = vmatprep.subr.mxu0 0.0
        %475 = vmatpush1.msra.mxu0 0.0
        %476 = vmatprep.mubr.f32.mxu0 0.0
        %477 = vmatmul.mubr.f32.gmra.mrb[0].mxu0 %v410
        %v478 = vpop.f32.mrb[0].mxu0
        %v479 = vadd.f32 0.0, %v478
        %v480 = vpop.f32.mrb[0].mxu0
        %481 = vdwg.mxu0
        %v483 = vsel %vm408, %v390, 0
        %485 = vmatprep.subr.mxu0 0.0
        %486 = vmatpush1.msra.mxu0 %v395
        %487 = vmatprep.subr.mxu0 0.0
        %488 = vmatpush1.msra.mxu0 %v396
        %489 = vmatprep.subr.mxu0 0.0
        %490 = vmatpush1.msra.mxu0 %v397
        %491 = vmatprep.subr.mxu0 0.0
        %492 = vmatpush1.msra.mxu0 %v398
        %493 = vmatprep.subr.mxu0 0.0
        %494 = vmatpush1.msra.mxu0 0.0
        %495 = vmatprep.subr.mxu0 0.0
        %496 = vmatpush1.msra.mxu0 0.0
        %497 = vmatprep.subr.mxu0 0.0
        %498 = vmatpush1.msra.mxu0 0.0
        %499 = vmatprep.subr.mxu0 0.0
        %500 = vmatpush1.msra.mxu0 0.0
        %501 = vmatprep.subr.mxu0 0.0
        %502 = vmatpush1.msra.mxu0 0.0
        %503 = vmatprep.subr.mxu0 0.0
        %504 = vmatpush1.msra.mxu0 0.0
        %505 = vmatprep.subr.mxu0 0.0
        %506 = vmatpush1.msra.mxu0 0.0
        %507 = vmatprep.subr.mxu0 0.0
        %508 = vmatpush1.msra.mxu0 0.0
        %509 = vmatprep.subr.mxu0 0.0
        %510 = vmatpush1.msra.mxu0 0.0
        %511 = vmatprep.subr.mxu0 0.0
        %512 = vmatpush1.msra.mxu0 0.0
        %513 = vmatprep.subr.mxu0 0.0
        %514 = vmatpush1.msra.mxu0 0.0
        %515 = vmatprep.subr.mxu0 0.0
        %516 = vmatpush1.msra.mxu0 0.0
        %517 = vmatprep.subr.mxu0 0.0
        %518 = vmatpush1.msra.mxu0 0.0
        %519 = vmatprep.subr.mxu0 0.0
        %520 = vmatpush1.msra.mxu0 0.0
        %521 = vmatprep.subr.mxu0 0.0
        %522 = vmatpush1.msra.mxu0 0.0
        %523 = vmatprep.subr.mxu0 0.0
        %524 = vmatpush1.msra.mxu0 0.0
        %525 = vmatprep.subr.mxu0 0.0
        %526 = vmatpush1.msra.mxu0 0.0
        %527 = vmatprep.subr.mxu0 0.0
        %528 = vmatpush1.msra.mxu0 0.0
        %529 = vmatprep.subr.mxu0 0.0
        %530 = vmatpush1.msra.mxu0 0.0
        %531 = vmatprep.subr.mxu0 0.0
        %532 = vmatpush1.msra.mxu0 0.0
        %533 = vmatprep.subr.mxu0 0.0
        %534 = vmatpush1.msra.mxu0 0.0
        %535 = vmatprep.subr.mxu0 0.0
        %536 = vmatpush1.msra.mxu0 0.0
        %537 = vmatprep.subr.mxu0 0.0
        %538 = vmatpush1.msra.mxu0 0.0
        %539 = vmatprep.subr.mxu0 0.0
        %540 = vmatpush1.msra.mxu0 0.0
        %541 = vmatprep.subr.mxu0 0.0
        %542 = vmatpush1.msra.mxu0 0.0
        %543 = vmatprep.subr.mxu0 0.0
        %544 = vmatpush1.msra.mxu0 0.0
        %545 = vmatprep.subr.mxu0 0.0
        %546 = vmatpush1.msra.mxu0 0.0
        %547 = vmatprep.subr.mxu0 0.0
        %548 = vmatpush1.msra.mxu0 0.0
        %549 = vmatprep.mubr.f32.mxu0 0.0
        %550 = vmatmul.mubr.f32.gmra.mrb[0].mxu0 %v483
        %v551 = vpop.f32.mrb[0].mxu0
        %v552 = vadd.f32 0.0, %v551
        %v553 = vpop.f32.mrb[0].mxu0
        %554 = vdwg.mxu0
        %555 = vmatprep.subr.mxu0 0.0
        %556 = vmatpush1.msra.mxu0 %v399
        %557 = vmatprep.subr.mxu0 0.0
        %558 = vmatpush1.msra.mxu0 %v400
        %559 = vmatprep.subr.mxu0 0.0
        %560 = vmatpush1.msra.mxu0 %v401
        %561 = vmatprep.subr.mxu0 0.0
        %562 = vmatpush1.msra.mxu0 %v402
        %563 = vmatprep.subr.mxu0 0.0
        %564 = vmatpush1.msra.mxu0 0.0
        %565 = vmatprep.subr.mxu0 0.0
        %566 = vmatpush1.msra.mxu0 0.0
        %567 = vmatprep.subr.mxu0 0.0
        %568 = vmatpush1.msra.mxu0 0.0
        %569 = vmatprep.subr.mxu0 0.0
        %570 = vmatpush1.msra.mxu0 0.0
        %571 = vmatprep.subr.mxu0 0.0
        %572 = vmatpush1.msra.mxu0 0.0
        %573 = vmatprep.subr.mxu0 0.0
        %574 = vmatpush1.msra.mxu0 0.0
        %575 = vmatprep.subr.mxu0 0.0
        %576 = vmatpush1.msra.mxu0 0.0
        %577 = vmatprep.subr.mxu0 0.0
        %578 = vmatpush1.msra.mxu0 0.0
        %579 = vmatprep.subr.mxu0 0.0
        %580 = vmatpush1.msra.mxu0 0.0
        %581 = vmatprep.subr.mxu0 0.0
        %582 = vmatpush1.msra.mxu0 0.0
        %583 = vmatprep.subr.mxu0 0.0
        %584 = vmatpush1.msra.mxu0 0.0
        %585 = vmatprep.subr.mxu0 0.0
        %586 = vmatpush1.msra.mxu0 0.0
        %587 = vmatprep.subr.mxu0 0.0
        %588 = vmatpush1.msra.mxu0 0.0
        %589 = vmatprep.subr.mxu0 0.0
        %590 = vmatpush1.msra.mxu0 0.0
        %591 = vmatprep.subr.mxu0 0.0
        %592 = vmatpush1.msra.mxu0 0.0
        %593 = vmatprep.subr.mxu0 0.0
        %594 = vmatpush1.msra.mxu0 0.0
        %595 = vmatprep.subr.mxu0 0.0
        %596 = vmatpush1.msra.mxu0 0.0
        %597 = vmatprep.subr.mxu0 0.0
        %598 = vmatpush1.msra.mxu0 0.0
        %599 = vmatprep.subr.mxu0 0.0
        %600 = vmatpush1.msra.mxu0 0.0
        %601 = vmatprep.subr.mxu0 0.0
        %602 = vmatpush1.msra.mxu0 0.0
        %603 = vmatprep.subr.mxu0 0.0
        %604 = vmatpush1.msra.mxu0 0.0
        %605 = vmatprep.subr.mxu0 0.0
        %606 = vmatpush1.msra.mxu0 0.0
        %607 = vmatprep.subr.mxu0 0.0
        %608 = vmatpush1.msra.mxu0 0.0
        %609 = vmatprep.subr.mxu0 0.0
        %610 = vmatpush1.msra.mxu0 0.0
        %611 = vmatprep.subr.mxu0 0.0
        %612 = vmatpush1.msra.mxu0 0.0
        %613 = vmatprep.subr.mxu0 0.0
        %614 = vmatpush1.msra.mxu0 0.0
        %615 = vmatprep.subr.mxu0 0.0
        %616 = vmatpush1.msra.mxu0 0.0
        %617 = vmatprep.subr.mxu0 0.0
        %618 = vmatpush1.msra.mxu0 0.0
        %619 = vmatprep.mubr.f32.mxu0 0.0
        %620 = vmatmul.mubr.f32.gmra.mrb[0].mxu0 %v483
        %v621 = vpop.f32.mrb[0].mxu0
        %v622 = vadd.f32 0.0, %v621
        %v623 = vpop.f32.mrb[0].mxu0
        %624 = vdwg.mxu0
        %vm625 = vcmask 130048
        %v627 = vsel %vm625, %v479, 0
        %v630 = vsel %vm625, %v552, 0
        %632 = vmatprep.subr.mxu0 0.0
        %633 = vmatpush1.xpose.msra.mxu0 %v630
        %634 = vmatprep.subr.mxu0 0.0
        %635 = vmatpush1.xpose.msra.mxu0 0.0
        %636 = vmatprep.subr.mxu0 0.0
        %637 = vmatpush1.xpose.msra.mxu0 0.0
        %638 = vmatprep.subr.mxu0 0.0
        %639 = vmatpush1.xpose.msra.mxu0 0.0
        %640 = vmatprep.subr.mxu0 0.0
        %641 = vmatpush1.xpose.msra.mxu0 0.0
        %642 = vmatprep.subr.mxu0 0.0
        %643 = vmatpush1.xpose.msra.mxu0 0.0
        %644 = vmatprep.subr.mxu0 0.0
        %645 = vmatpush1.xpose.msra.mxu0 0.0
        %646 = vmatprep.subr.mxu0 0.0
        %647 = vmatpush1.xpose.msra.mxu0 0.0
        %648 = vmatprep.subr.mxu0 0.0
        %649 = vmatpush1.xpose.msra.mxu0 0.0
        %650 = vmatprep.subr.mxu0 0.0
        %651 = vmatpush1.xpose.msra.mxu0 0.0
        %652 = vmatprep.subr.mxu0 0.0
        %653 = vmatpush1.xpose.msra.mxu0 0.0
        %654 = vmatprep.subr.mxu0 0.0
        %655 = vmatpush1.xpose.msra.mxu0 0.0
        %656 = vmatprep.subr.mxu0 0.0
        %657 = vmatpush1.xpose.msra.mxu0 0.0
        %658 = vmatprep.subr.mxu0 0.0
        %659 = vmatpush1.xpose.msra.mxu0 0.0
        %660 = vmatprep.subr.mxu0 0.0
        %661 = vmatpush1.xpose.msra.mxu0 0.0
        %662 = vmatprep.subr.mxu0 0.0
        %663 = vmatpush1.xpose.msra.mxu0 0.0
        %664 = vmatprep.subr.mxu0 0.0
        %665 = vmatpush1.xpose.msra.mxu0 0.0
        %666 = vmatprep.subr.mxu0 0.0
        %667 = vmatpush1.xpose.msra.mxu0 0.0
        %668 = vmatprep.subr.mxu0 0.0
        %669 = vmatpush1.xpose.msra.mxu0 0.0
        %670 = vmatprep.subr.mxu0 0.0
        %671 = vmatpush1.xpose.msra.mxu0 0.0
        %672 = vmatprep.subr.mxu0 0.0
        %673 = vmatpush1.xpose.msra.mxu0 0.0
        %674 = vmatprep.subr.mxu0 0.0
        %675 = vmatpush1.xpose.msra.mxu0 0.0
        %676 = vmatprep.subr.mxu0 0.0
        %677 = vmatpush1.xpose.msra.mxu0 0.0
        %678 = vmatprep.subr.mxu0 0.0
        %679 = vmatpush1.xpose.msra.mxu0 0.0
        %680 = vmatprep.subr.mxu0 0.0
        %681 = vmatpush1.xpose.msra.mxu0 0.0
        %682 = vmatprep.subr.mxu0 0.0
        %683 = vmatpush1.xpose.msra.mxu0 0.0
        %684 = vmatprep.subr.mxu0 0.0
        %685 = vmatpush1.xpose.msra.mxu0 0.0
        %686 = vmatprep.subr.mxu0 0.0
        %687 = vmatpush1.xpose.msra.mxu0 0.0
        %688 = vmatprep.subr.mxu0 0.0
        %689 = vmatpush1.xpose.msra.mxu0 0.0
        %690 = vmatprep.subr.mxu0 0.0
        %691 = vmatpush1.xpose.msra.mxu0 0.0
        %692 = vmatprep.subr.mxu0 0.0
        %693 = vmatpush1.xpose.msra.mxu0 0.0
        %694 = vmatprep.subr.mxu0 0.0
        %695 = vmatpush1.xpose.msra.mxu0 0.0
        %696 = vmatprep.mubr.f32.mxu0 0.0
        %697 = vmatmul.mubr.f32.gmra.mrb[0].mxu0 %v627
        %v698 = vpop.f32.mrb[0].mxu0
        %v699 = vadd.f32 0.0, %v698
        %v700 = vpop.f32.mrb[0].mxu0
        %701 = vdwg.mxu0
        %v702 = vmul.f32 %v699, 0.25
        %vm703 = vcmask 64512
        %v704 = vsel %vm703, %v702, -inf
        %705 = vmax.xlane.f32.xlu0 %v704
        %v706 = vpop.xlane.xlu0 %705
        %v707 = vsub.f32 %v702, %v706
        %v708 = vmul.f32 %v707, 1.442695
        %v709 = vpow.pop %v708
        %v710 = vsel %vm703, %v709, 0.0
        %711 = vadd.xlane.f32.xlu0 %v710
        %v712 = vpop.xlane.xlu0 %711
        %v714 = vsel %vm703, %v709, 0
        %716 = vmatprep.subr.mxu0 0.0
        %717 = vmatpush1.msra.mxu0 %v622
        %718 = vmatprep.subr.mxu0 0.0
        %719 = vmatpush1.msra.mxu0 0.0
        %720 = vmatprep.subr.mxu0 0.0
        %721 = vmatpush1.msra.mxu0 0.0
        %722 = vmatprep.subr.mxu0 0.0
        %723 = vmatpush1.msra.mxu0 0.0
        %724 = vmatprep.subr.mxu0 0.0
        %725 = vmatpush1.msra.mxu0 0.0
        %726 = vmatprep.subr.mxu0 0.0
        %727 = vmatpush1.msra.mxu0 0.0
        %728 = vmatprep.subr.mxu0 0.0
        %729 = vmatpush1.msra.mxu0 0.0
        %730 = vmatprep.subr.mxu0 0.0
        %731 = vmatpush1.msra.mxu0 0.0
        %732 = vmatprep.subr.mxu0 0.0
        %733 = vmatpush1.msra.mxu0 0.0
        %734 = vmatprep.subr.mxu0 0.0
        %735 = vmatpush1.msra.mxu0 0.0
        %736 = vmatprep.subr.mxu0 0.0
        %737 = vmatpush1.msra.mxu0 0.0
        %738 = vmatprep.subr.mxu0 0.0
        %739 = vmatpush1.msra.mxu0 0.0
        %740 = vmatprep.subr.mxu0 0.0
        %741 = vmatpush1.msra.mxu0 0.0
        %742 = vmatprep.subr.mxu0 0.0
        %743 = vmatpush1.msra.mxu0 0.0
        %744 = vmatprep.subr.mxu0 0.0
        %745 = vmatpush1.msra.mxu0 0.0
        %746 = vmatprep.subr.mxu0 0.0
        %747 = vmatpush1.msra.mxu0 0.0
        %748 = vmatprep.subr.mxu0 0.0
        %749 = vmatpush1.msra.mxu0 0.0
        %750 = vmatprep.subr.mxu0 0.0
        %751 = vmatpush1.msra.mxu0 0.0
        %752 = vmatprep.subr.mxu0 0.0
        %753 = vmatpush1.msra.mxu0 0.0
        %754 = vmatprep.subr.mxu0 0.0
        %755 = vmatpush1.msra.mxu0 0.0
        %756 = vmatprep.subr.mxu0 0.0
        %757 = vmatpush1.msra.mxu0 0.0
        %758 = vmatprep.subr.mxu0 0.0
        %759 = vmatpush1.msra.mxu0 0.0
        %760 = vmatprep.subr.mxu0 0.0
        %761 = vmatpush1.msra.mxu0 0.0
        %762 = vmatprep.subr.mxu0 0.0
        %763 = vmatpush1.msra.mxu0 0.0
        %764 = vmatprep.subr.mxu0 0.0
        %765 = vmatpush1.msra.mxu0 0.0
        %766 = vmatprep.subr.mxu0 0.0
        %767 = vmatpush1.msra.mxu0 0.0
        %768 = vmatprep.subr.mxu0 0.0
        %769 = vmatpush1.msra.mxu0 0.0
        %770 = vmatprep.subr.mxu0 0.0
        %771 = vmatpush1.msra.mxu0 0.0
        %772 = vmatprep.subr.mxu0 0.0
        %773 = vmatpush1.msra.mxu0 0.0
        %774 = vmatprep.subr.mxu0 0.0
        %775 = vmatpush1.msra.mxu0 0.0
        %776 = vmatprep.subr.mxu0 0.0
        %777 = vmatpush1.msra.mxu0 0.0
        %778 = vmatprep.subr.mxu0 0.0
        %779 = vmatpush1.msra.mxu0 0.0
        %780 = vmatprep.mubr.f32.mxu0 0.0
        %781 = vmatmul.mubr.f32.gmra.mrb[0].mxu0 %v714
        %v782 = vpop.f32.mrb[0].mxu0
        %v783 = vadd.f32 0.0, %v782
        %v784 = vpop.f32.mrb[0].mxu0
        %785 = vdwg.mxu0
        %v786 = vrcp.pop %v712
        %v787 = vmul.f32 %v783, %v786
        %788 = vrot.lane.b32.xlu0 %v479, 112
        %v789 = vpop.permute.xlu0 %788
        %790 = vrot.lane.b32.xlu0 %v552, 112
        %v791 = vpop.permute.xlu0 %790
        %v792 = vsel %vm625, %v789, 0
        %v794 = vsel %vm625, %v791, 0
        %796 = vmatprep.subr.mxu0 0.0
        %797 = vmatpush1.xpose.msra.mxu0 %v794
        %798 = vmatprep.subr.mxu0 0.0
        %799 = vmatpush1.xpose.msra.mxu0 0.0
        %800 = vmatprep.subr.mxu0 0.0
        %801 = vmatpush1.xpose.msra.mxu0 0.0
        %802 = vmatprep.subr.mxu0 0.0
        %803 = vmatpush1.xpose.msra.mxu0 0.0
        %804 = vmatprep.subr.mxu0 0.0
        %805 = vmatpush1.xpose.msra.mxu0 0.0
        %806 = vmatprep.subr.mxu0 0.0
        %807 = vmatpush1.xpose.msra.mxu0 0.0
        %808 = vmatprep.subr.mxu0 0.0
        %809 = vmatpush1.xpose.msra.mxu0 0.0
        %810 = vmatprep.subr.mxu0 0.0
        %811 = vmatpush1.xpose.msra.mxu0 0.0
        %812 = vmatprep.subr.mxu0 0.0
        %813 = vmatpush1.xpose.msra.mxu0 0.0
        %814 = vmatprep.subr.mxu0 0.0
        %815 = vmatpush1.xpose.msra.mxu0 0.0
        %816 = vmatprep.subr.mxu0 0.0
        %817 = vmatpush1.xpose.msra.mxu0 0.0
        %818 = vmatprep.subr.mxu0 0.0
        %819 = vmatpush1.xpose.msra.mxu0 0.0
        %820 = vmatprep.subr.mxu0 0.0
        %821 = vmatpush1.xpose.msra.mxu0 0.0
        %822 = vmatprep.subr.mxu0 0.0
        %823 = vmatpush1.xpose.msra.mxu0 0.0
        %824 = vmatprep.subr.mxu0 0.0
        %825 = vmatpush1.xpose.msra.mxu0 0.0
        %826 = vmatprep.subr.mxu0 0.0
        %827 = vmatpush1.xpose.msra.mxu0 0.0
        %828 = vmatprep.subr.mxu0 0.0
        %829 = vmatpush1.xpose.msra.mxu0 0.0
        %830 = vmatprep.subr.mxu0 0.0
        %831 = vmatpush1.xpose.msra.mxu0 0.0
        %832 = vmatprep.subr.mxu0 0.0
        %833 = vmatpush1.xpose.msra.mxu0 0.0
        %834 = vmatprep.subr.mxu0 0.0
        %835 = vmatpush1.xpose.msra.mxu0 0.0
        %836 = vmatprep.subr.mxu0 0.0
        %837 = vmatpush1.xpose.msra.mxu0 0.0
        %838 = vmatprep.subr.mxu0 0.0
        %839 = vmatpush1.xpose.msra.mxu0 0.0
        %840 = vmatprep.subr.mxu0 0.0
        %841 = vmatpush1.xpose.msra.mxu0 0.0
        %842 = vmatprep.subr.mxu0 0.0
        %843 = vmatpush1.xpose.msra.mxu0 0.0
        %844 = vmatprep.subr.mxu0 0.0
        %845 = vmatpush1.xpose.msra.mxu0 0.0
        %846 = vmatprep.subr.mxu0 0.0
        %847 = vmatpush1.xpose.msra.mxu0 0.0
        %848 = vmatprep.subr.mxu0 0.0
        %849 = vmatpush1.xpose.msra.mxu0 0.0
        %850 = vmatprep.subr.mxu0 0.0
        %851 = vmatpush1.xpose.msra.mxu0 0.0
        %852 = vmatprep.subr.mxu0 0.0
        %853 = vmatpush1.xpose.msra.mxu0 0.0
        %854 = vmatprep.subr.mxu0 0.0
        %855 = vmatpush1.xpose.msra.mxu0 0.0
        %856 = vmatprep.subr.mxu0 0.0
        %857 = vmatpush1.xpose.msra.mxu0 0.0
        %858 = vmatprep.subr.mxu0 0.0
        %859 = vmatpush1.xpose.msra.mxu0 0.0
        %860 = vmatprep.mubr.f32.mxu0 0.0
        %861 = vmatmul.mubr.f32.gmra.mrb[0].mxu0 %v792
        %v862 = vpop.f32.mrb[0].mxu0
        %v863 = vadd.f32 0.0, %v862
        %v864 = vpop.f32.mrb[0].mxu0
        %865 = vdwg.mxu0
        %v866 = vmul.f32 %v863, 0.25
        %v867 = vsel %vm703, %v866, -inf
        %868 = vmax.xlane.f32.xlu0 %v867
        %v869 = vpop.xlane.xlu0 %868
        %v870 = vsub.f32 %v866, %v869
        %v871 = vmul.f32 %v870, 1.442695
        %v872 = vpow.pop %v871
        %v873 = vsel %vm703, %v872, 0.0
        %874 = vadd.xlane.f32.xlu0 %v873
        %v875 = vpop.xlane.xlu0 %874
        %877 = vrot.lane.b32.xlu0 %v622, 112
        %v878 = vpop.permute.xlu0 %877
        %v881 = vsel %vm703, %v872, 0
        %883 = vmatprep.subr.mxu0 0.0
        %884 = vmatpush1.msra.mxu0 %v878
        %885 = vmatprep.subr.mxu0 0.0
        %886 = vmatpush1.msra.mxu0 0.0
        %887 = vmatprep.subr.mxu0 0.0
        %888 = vmatpush1.msra.mxu0 0.0
        %889 = vmatprep.subr.mxu0 0.0
        %890 = vmatpush1.msra.mxu0 0.0
        %891 = vmatprep.subr.mxu0 0.0
        %892 = vmatpush1.msra.mxu0 0.0
        %893 = vmatprep.subr.mxu0 0.0
        %894 = vmatpush1.msra.mxu0 0.0
        %895 = vmatprep.subr.mxu0 0.0
        %896 = vmatpush1.msra.mxu0 0.0
        %897 = vmatprep.subr.mxu0 0.0
        %898 = vmatpush1.msra.mxu0 0.0
        %899 = vmatprep.subr.mxu0 0.0
        %900 = vmatpush1.msra.mxu0 0.0
        %901 = vmatprep.subr.mxu0 0.0
        %902 = vmatpush1.msra.mxu0 0.0
        %903 = vmatprep.subr.mxu0 0.0
        %904 = vmatpush1.msra.mxu0 0.0
        %905 = vmatprep.subr.mxu0 0.0
        %906 = vmatpush1.msra.mxu0 0.0
        %907 = vmatprep.subr.mxu0 0.0
        %908 = vmatpush1.msra.mxu0 0.0
        %909 = vmatprep.subr.mxu0 0.0
        %910 = vmatpush1.msra.mxu0 0.0
        %911 = vmatprep.subr.mxu0 0.0
        %912 = vmatpush1.msra.mxu0 0.0
        %913 = vmatprep.subr.mxu0 0.0
        %914 = vmatpush1.msra.mxu0 0.0
        %915 = vmatprep.subr.mxu0 0.0
        %916 = vmatpush1.msra.mxu0 0.0
        %917 = vmatprep.subr.mxu0 0.0
        %918 = vmatpush1.msra.mxu0 0.0
        %919 = vmatprep.subr.mxu0 0.0
        %920 = vmatpush1.msra.mxu0 0.0
        %921 = vmatprep.subr.mxu0 0.0
        %922 = vmatpush1.msra.mxu0 0.0
        %923 = vmatprep.subr.mxu0 0.0
        %924 = vmatpush1.msra.mxu0 0.0
        %925 = vmatprep.subr.mxu0 0.0
        %926 = vmatpush1.msra.mxu0 0.0
        %927 = vmatprep.subr.mxu0 0.0
        %928 = vmatpush1.msra.mxu0 0.0
        %929 = vmatprep.subr.mxu0 0.0
        %930 = vmatpush1.msra.mxu0 0.0
        %931 = vmatprep.subr.mxu0 0.0
        %932 = vmatpush1.msra.mxu0 0.0
        %933 = vmatprep.subr.mxu0 0.0
        %934 = vmatpush1.msra.mxu0 0.0
        %935 = vmatprep.subr.mxu0 0.0
        %936 = vmatpush1.msra.mxu0 0.0
        %937 = vmatprep.subr.mxu0 0.0
        %938 = vmatpush1.msra.mxu0 0.0
        %939 = vmatprep.subr.mxu0 0.0
        %940 = vmatpush1.msra.mxu0 0.0
        %941 = vmatprep.subr.mxu0 0.0
        %942 = vmatpush1.msra.mxu0 0.0
        %943 = vmatprep.subr.mxu0 0.0
        %944 = vmatpush1.msra.mxu0 0.0
        %945 = vmatprep.subr.mxu0 0.0
        %946 = vmatpush1.msra.mxu0 0.0
        %947 = vmatprep.mubr.f32.mxu0 0.0
        %948 = vmatmul.mubr.f32.gmra.mrb[0].mxu0 %v881
        %v949 = vpop.f32.mrb[0].mxu0
        %v950 = vadd.f32 0.0, %v949
        %v951 = vpop.f32.mrb[0].mxu0
        %952 = vdwg.mxu0
        %v953 = vrcp.pop %v875
        %v954 = vmul.f32 %v950, %v953
        %v956 = vsel %vm625, %v954, 0
        %958 = vmatprep.subr.mxu0 0.0
        %959 = vmatpush1.msra.mxu0 %v405
        %960 = vmatprep.subr.mxu0 0.0
        %961 = vmatpush1.msra.mxu0 %v406
        %962 = vmatprep.subr.mxu0 0.0
        %963 = vmatpush1.msra.mxu0 0.0
        %964 = vmatprep.subr.mxu0 0.0
        %965 = vmatpush1.msra.mxu0 0.0
        %966 = vmatprep.subr.mxu0 0.0
        %967 = vmatpush1.msra.mxu0 0.0
        %968 = vmatprep.subr.mxu0 0.0
        %969 = vmatpush1.msra.mxu0 0.0
        %970 = vmatprep.subr.mxu0 0.0
        %971 = vmatpush1.msra.mxu0 0.0
        %972 = vmatprep.subr.mxu0 0.0
        %973 = vmatpush1.msra.mxu0 0.0
        %974 = vmatprep.subr.mxu0 0.0
        %975 = vmatpush1.msra.mxu0 0.0
        %976 = vmatprep.subr.mxu0 0.0
        %977 = vmatpush1.msra.mxu0 0.0
        %978 = vmatprep.subr.mxu0 0.0
        %979 = vmatpush1.msra.mxu0 0.0
        %980 = vmatprep.subr.mxu0 0.0
        %981 = vmatpush1.msra.mxu0 0.0
        %982 = vmatprep.subr.mxu0 0.0
        %983 = vmatpush1.msra.mxu0 0.0
        %984 = vmatprep.subr.mxu0 0.0
        %985 = vmatpush1.msra.mxu0 0.0
        %986 = vmatprep.subr.mxu0 0.0
        %987 = vmatpush1.msra.mxu0 0.0
        %988 = vmatprep.subr.mxu0 0.0
        %989 = vmatpush1.msra.mxu0 0.0
        %990 = vmatprep.subr.mxu0 0.0
        %991 = vmatpush1.msra.mxu0 0.0
        %992 = vmatprep.subr.mxu0 0.0
        %993 = vmatpush1.msra.mxu0 0.0
        %994 = vmatprep.subr.mxu0 0.0
        %995 = vmatpush1.msra.mxu0 0.0
        %996 = vmatprep.subr.mxu0 0.0
        %997 = vmatpush1.msra.mxu0 0.0
        %998 = vmatprep.subr.mxu0 0.0
        %999 = vmatpush1.msra.mxu0 0.0
        %1000 = vmatprep.subr.mxu0 0.0
        %1001 = vmatpush1.msra.mxu0 0.0
        %1002 = vmatprep.subr.mxu0 0.0
        %1003 = vmatpush1.msra.mxu0 0.0
        %1004 = vmatprep.subr.mxu0 0.0
        %1005 = vmatpush1.msra.mxu0 0.0
        %1006 = vmatprep.subr.mxu0 0.0
        %1007 = vmatpush1.msra.mxu0 0.0
        %1008 = vmatprep.subr.mxu0 0.0
        %1009 = vmatpush1.msra.mxu0 0.0
        %1010 = vmatprep.subr.mxu0 0.0
        %1011 = vmatpush1.msra.mxu0 0.0
        %1012 = vmatprep.subr.mxu0 0.0
        %1013 = vmatpush1.msra.mxu0 0.0
        %1014 = vmatprep.subr.mxu0 0.0
        %1015 = vmatpush1.msra.mxu0 0.0
        %1016 = vmatprep.subr.mxu0 0.0
        %1017 = vmatpush1.msra.mxu0 0.0
        %1018 = vmatprep.subr.mxu0 0.0
        %1019 = vmatpush1.msra.mxu0 0.0
        %1020 = vmatprep.subr.mxu0 0.0
        %1021 = vmatpush1.msra.mxu0 0.0
        %1022 = vmatprep.mubr.f32.mxu0 0.0
        %1023 = vmatmul.mubr.f32.gmra.mrb[0].mxu0 %v956
        %v1024 = vpop.f32.mrb[0].mxu0
        %v1025 = vadd.f32 0.0, %v1024
        %v1026 = vpop.f32.mrb[0].mxu0
        %1027 = vdwg.mxu0
        %v1029 = vsel %vm625, %v787, 0
        %1031 = vmatprep.subr.mxu0 0.0
        %1032 = vmatpush1.msra.mxu0 %v403
        %1033 = vmatprep.subr.mxu0 0.0
        %1034 = vmatpush1.msra.mxu0 %v404
        %1035 = vmatprep.subr.mxu0 0.0
        %1036 = vmatpush1.msra.mxu0 0.0
        %1037 = vmatprep.subr.mxu0 0.0
        %1038 = vmatpush1.msra.mxu0 0.0
        %1039 = vmatprep.subr.mxu0 0.0
        %1040 = vmatpush1.msra.mxu0 0.0
        %1041 = vmatprep.subr.mxu0 0.0
        %1042 = vmatpush1.msra.mxu0 0.0
        %1043 = vmatprep.subr.mxu0 0.0
        %1044 = vmatpush1.msra.mxu0 0.0
        %1045 = vmatprep.subr.mxu0 0.0
        %1046 = vmatpush1.msra.mxu0 0.0
        %1047 = vmatprep.subr.mxu0 0.0
        %1048 = vmatpush1.msra.mxu0 0.0
        %1049 = vmatprep.subr.mxu0 0.0
        %1050 = vmatpush1.msra.mxu0 0.0
        %1051 = vmatprep.subr.mxu0 0.0
        %1052 = vmatpush1.msra.mxu0 0.0
        %1053 = vmatprep.subr.mxu0 0.0
        %1054 = vmatpush1.msra.mxu0 0.0
        %1055 = vmatprep.subr.mxu0 0.0
        %1056 = vmatpush1.msra.mxu0 0.0
        %1057 = vmatprep.subr.mxu0 0.0
        %1058 = vmatpush1.msra.mxu0 0.0
        %1059 = vmatprep.subr.mxu0 0.0
        %1060 = vmatpush1.msra.mxu0 0.0
        %1061 = vmatprep.subr.mxu0 0.0
        %1062 = vmatpush1.msra.mxu0 0.0
        %1063 = vmatprep.subr.mxu0 0.0
        %1064 = vmatpush1.msra.mxu0 0.0
        %1065 = vmatprep.subr.mxu0 0.0
        %1066 = vmatpush1.msra.mxu0 0.0
        %1067 = vmatprep.subr.mxu0 0.0
        %1068 = vmatpush1.msra.mxu0 0.0
        %1069 = vmatprep.subr.mxu0 0.0
        %1070 = vmatpush1.msra.mxu0 0.0
        %1071 = vmatprep.subr.mxu0 0.0
        %1072 = vmatpush1.msra.mxu0 0.0
        %1073 = vmatprep.subr.mxu0 0.0
        %1074 = vmatpush1.msra.mxu0 0.0
        %1075 = vmatprep.subr.mxu0 0.0
        %1076 = vmatpush1.msra.mxu0 0.0
        %1077 = vmatprep.subr.mxu0 0.0
        %1078 = vmatpush1.msra.mxu0 0.0
        %1079 = vmatprep.subr.mxu0 0.0
        %1080 = vmatpush1.msra.mxu0 0.0
        %1081 = vmatprep.subr.mxu0 0.0
        %1082 = vmatpush1.msra.mxu0 0.0
        %1083 = vmatprep.subr.mxu0 0.0
        %1084 = vmatpush1.msra.mxu0 0.0
        %1085 = vmatprep.subr.mxu0 0.0
        %1086 = vmatpush1.msra.mxu0 0.0
        %1087 = vmatprep.subr.mxu0 0.0
        %1088 = vmatpush1.msra.mxu0 0.0
        %1089 = vmatprep.subr.mxu0 0.0
        %1090 = vmatpush1.msra.mxu0 0.0
        %1091 = vmatprep.subr.mxu0 0.0
        %1092 = vmatpush1.msra.mxu0 0.0
        %1093 = vmatprep.subr.mxu0 0.0
        %1094 = vmatpush1.msra.mxu0 0.0
        %1095 = vmatprep.mubr.f32.mxu0 0.0
        %1096 = vmatmul.mubr.f32.gmra.mrb[0].mxu0 %v1029
        %v1097 = vpop.f32.mrb[0].mxu0
        %v1098 = vadd.f32 %v1025, %v1097
        %v1099 = vpop.f32.mrb[0].mxu0
        %1100 = vdwg.mxu0
        %v1102 = vlaneseq
        %v1103 = vshrl.u32 %v1102, 7
        %v1104 = vsub.s32 0, %v1103
        %v1105 = vrot.slane %v407, %v1104
        %v1107 = vadd.f32 %v1098, %v1105
        %1108 = vst.msk [vmem:[%s388] sm:$0xff] %vm408, %v1107
        %s1109 = sand.u32 %s194, 1
        %s1110 = scalar_lea.sflag [#allocation4], %s1109
        %s1111 = sand.u32 %s194, 1
        %s1112 = smul.addr %s1111, 8
        %s1113 = scalar_lea.vmem [#allocation13], %s1112
        // Predicated region
        $region73: #{tpu_custom_call.1} parent=47 // pred_check
          %p1114 = pneg %p204
        $region74: #{tpu_custom_call.1} parent=47 // pred_check_branch
          %1116 = sbr.rel (%p1114) target = $region76
        $region75: #{tpu_custom_call.1} parent=47 // pred_region
          %s1118 = ssub.s32 128, 128
          %1119 = vsyncadd %s1110, %s1118
          %s1120 = smul.addr %s29, 128
          %s1121 = scalar_lea.hbm %s7, %s1120
          %s1123 = sshll.u32 %s1113, 4
          %s1124 = int_to_ptr.vmem [resolvable:$true] %s1123
          %1126 = dma.vmem_to_hbm [thread:$0]  %s1124, 128, %s1121, %s1110
        $region76: #{tpu_custom_call.1} parent=47 // pred_fallthru
          _
      $region48: #{tpu_custom_call.1} parent=5 // pred_fallthru
        _
      %p1127 = scmp.le.s32.totalorder 2, %s24
      // Predicated region
      $region77: #{tpu_custom_call.1} parent=5 // pred_check
        %p1128 = pneg %p1127
      $region78: #{tpu_custom_call.1} parent=5 // pred_check_branch
        %1130 = sbr.rel (%p1128) target = $region80
      $region79: #{tpu_custom_call.1} parent=5 // pred_region
        %s1131 = ssub.s32 %s24, 2
        // Predicated region
        $region81: #{tpu_custom_call.1} parent=79 // pred_check
          %p1132 = pneg %p210
        $region82: #{tpu_custom_call.1} parent=79 // pred_check_branch
          %1134 = sbr.rel (%p1132) target = $region84
        $region83: #{tpu_custom_call.1} parent=79 // pred_region
          %s1135 = sand.u32 %s195, 1
          %s1136 = scalar_lea.sflag [#allocation4], %s1135
          %s1137 = sand.u32 %s195, 1
          %s1138 = smul.addr %s1137, 8
          %s1139 = scalar_lea.vmem [#allocation13], %s1138
          %1140 = dma.done %s1136, 128
        $region84: #{tpu_custom_call.1} parent=79 // pred_fallthru
          _
      $region80: #{tpu_custom_call.1} parent=5 // pred_fallthru
        _
    $region6: #{tpu_custom_call.1} parent=1 // loop_footer
      %s28 = sadd.s32 1, %s24
    $region7: #{tpu_custom_call.1} parent=1 // loop_footer_branch
      %23 = sbr.rel target = $region3
    $region8: #{tpu_custom_call.1} parent=1 // loop_exit
      _
    %1141 = vsyncpa [#allocation3], 1
    %s1142 = scalar_lea.sflag [#allocation3], 1
    %1143 = vsyncpa %s1142, 1
    %1144 = vsyncpa [#allocation6], 1
    %s1145 = scalar_lea.sflag [#allocation6], 1
    %1146 = vsyncpa %s1145, 1
    %1147 = vsyncpa [#allocation9], 1
    %1148 = vsyncpa [#allocation12], 1
    %1149 = vsyncpa [#allocation4], 1
    %s1150 = scalar_lea.sflag [#allocation4], 1
    %1151 = vsyncpa %s1150, 1

</llo_original>
